<compile_context>
chip_gen: v5e
topology: v5e:2x2
jax: 0.10.0
libtpu: 0.0.40
codegen_flags: <defaults>
</compile_context>

<pallas_src>
import functools

import jax
import jax.numpy as jnp
from jax import lax
from jax.experimental import pallas as pl
from jax.experimental.pallas import tpu as pltpu


# --------------------------------------------------------------------------- #
# Kernels
# --------------------------------------------------------------------------- #
def _embed_hbm_gather_kernel(tb, seq_len, tok_ref, table_hbm, pos_ref, out_ref, sem):
    """Gather tb*seq_len embedding rows from HBM directly into out_ref, add positions.

    tok_ref   : (B*S,) int32 in SMEM (scalar prefetch) - flattened token ids.
    table_hbm : (V, E) token-embedding table, left in HBM (pl.ANY).
    pos_ref   : (S, E) position embedding, VMEM-resident (constant index_map).
    out_ref   : (tb, S, E) output block for this grid step (also the gather target).
    sem       : single shared DMA semaphore.
    """
    bb = pl.program_id(0)
    base = bb * tb * seq_len  # flat token offset of this (tb, S) tile

    def row_copy(b, s):
        tok_id = tok_ref[base + b * seq_len + s]
        return pltpu.make_async_copy(
            table_hbm.at[pl.ds(tok_id, 1), :],     # (1, E) row in HBM
            out_ref.at[b, pl.ds(s, 1), :],         # (1, E) slot in the output block
            sem,
        )

    # Issue all row gathers first (many DMAs in flight on one shared semaphore) ...
    for b in range(tb):                            # static, small
        def start_body(s, carry, b=b):
            row_copy(b, s).start()
            return carry
        lax.fori_loop(0, seq_len, start_body, 0, unroll=8)

    # ... then wait for each of them.  The descriptor is rebuilt from the same
    # token id / destination slice, so every wait matches its start exactly.
    for b in range(tb):
        def wait_body(s, carry, b=b):
            row_copy(b, s).wait()
            return carry
        lax.fori_loop(0, seq_len, wait_body, 0, unroll=8)

    # One vectorized add + one dense (tb, S, E) store.
    out_ref[...] = (out_ref[...] + pos_ref[...][None, :, :]).astype(out_ref.dtype)


def _embed_vmem_table_kernel(tb, seq_len, tok_ref, table_ref, pos_ref, out_ref):
    """Table resident in VMEM: gather rows with in-VMEM dynamic loads, add positions."""
    bb = pl.program_id(0)
    base = bb * tb * seq_len

    for b in range(tb):                            # static, small
        def body(s, carry, b=b):
            tok_id = tok_ref[base + b * seq_len + s]
            row = table_ref[pl.ds(tok_id, 1), :] + pos_ref[pl.ds(s, 1), :]  # (1, E)
            out_ref[b, pl.ds(s, 1), :] = row.astype(out_ref.dtype)
            return carry
        lax.fori_loop(0, seq_len, body, 0, unroll=8)


# --------------------------------------------------------------------------- #
# Wrapper
# --------------------------------------------------------------------------- #
def clip_embedding(tokens, token_table, pos_table, *,
                   max_rows_per_step=512,
                   max_out_block_bytes=4 << 20,      # double-buffered output block
                   vmem_table_budget_bytes=10 << 20, # table fast-path threshold
                   force_hbm_gather=False):
    """tokens: (B, S) int32; token_table: (V, E); pos_table: (S, E) -> (B, S, E)."""
    B, S = tokens.shape
    V, E = token_table.shape
    assert pos_table.shape == (S, E)

    out_dtype = token_table.dtype
    itemsize = jnp.dtype(out_dtype).itemsize

    # --- batch-tile selection ------------------------------------------------
    # Largest divisor of B such that:
    #   * per-step row count stays modest (DMA descriptor issue / loop length),
    #   * the double-buffered output block fits a small VMEM budget,
    #   * the grid keeps >= 2 steps when B >= 2 (megacore sharding + pipelining).
    tb = 1
    for cand in range(B, 0, -1):
        if B % cand != 0:
            continue
        if cand * S > max_rows_per_step:
            continue
        if 2 * cand * S * E * itemsize > max_out_block_bytes:
            continue
        if B >= 2 and B // cand < 2:
            continue
        tb = cand
        break

    out_block_bytes = 2 * tb * S * E * itemsize
    # TODO(synk): if even tb=1 blows this budget (very long S * wide E), split the
    # gather along S with a second grid axis instead of asserting.
    assert out_block_bytes <= (24 << 20), (
        f"output block too large for VMEM budget: {out_block_bytes} bytes")

    flat_tokens = tokens.reshape(-1).astype(jnp.int32)  # scalar-prefetch arg (SMEM)
    grid = (B // tb,)

    table_bytes = V * E * itemsize
    use_vmem_table = (not force_hbm_gather) and (table_bytes <= vmem_table_budget_bytes)

    out_shape = jax.ShapeDtypeStruct((B, S, E), out_dtype)
    out_spec = pl.BlockSpec((tb, S, E), lambda bb, tok: (bb, 0, 0))
    # Position table: full array, constant block index -> fetched once, stays
    # resident in VMEM across all grid steps.
    pos_spec = pl.BlockSpec((S, E), lambda bb, tok: (0, 0))

    if use_vmem_table:
        grid_spec = pltpu.PrefetchScalarGridSpec(
            num_scalar_prefetch=1,
            grid=grid,
            in_specs=[
                # Whole embedding table resident in VMEM (fetched once).
                pl.BlockSpec((V, E), lambda bb, tok: (0, 0)),
                pos_spec,
            ],
            out_specs=out_spec,
        )
        kernel = functools.partial(_embed_vmem_table_kernel, tb, S)
    else:
        grid_spec = pltpu.PrefetchScalarGridSpec(
            num_scalar_prefetch=1,
            grid=grid,
            in_specs=[
                # Embedding table stays in HBM; rows gathered by manual DMA.
                pl.BlockSpec(memory_space=pl.ANY),
                pos_spec,
            ],
            out_specs=out_spec,
            scratch_shapes=[pltpu.SemaphoreType.DMA],   # ONE shared DMA semaphore
        )
        kernel = functools.partial(_embed_hbm_gather_kernel, tb, S)

    return pl.pallas_call(
        kernel,
        out_shape=out_shape,
        grid_spec=grid_spec,
        compiler_params=pltpu.CompilerParams(
            dimension_semantics=("parallel",)),
    )(flat_tokens, token_table, pos_table)


# --------------------------------------------------------------------------- #
# Demo / correctness check
# --------------------------------------------------------------------------- #
if __name__ == "__main__":
    key = jax.random.PRNGKey(0)
    k_tok, k_emb, k_pos = jax.random.split(key, 3)

    n_vocab, n_embed, n_tokens = 64, 128, 8
    batch = 2

    # nn.Embedding weight ~ N(0,1); position_embedding is torch.zeros in the module
    # __init__ — use small deterministic non-zero values here so the add path is
    # actually exercised.
    token_table = jax.random.normal(k_emb, (n_vocab, n_embed), dtype=jnp.float32)
    pos_table = 0.01 * jax.random.normal(k_pos, (n_tokens, n_embed), dtype=jnp.float32)
    tokens = jax.random.randint(k_tok, (batch, n_tokens), 0, n_vocab, dtype=jnp.int32)

    # Pure-JAX reference: x = table[tokens]; x += pos
    ref = token_table[tokens] + pos_table[None, :, :]

    # Fast path: table resident in VMEM (auto-selected for this small table).
    out_fast = jax.block_until_ready(clip_embedding(tokens, token_table, pos_table))
    assert out_fast.shape == (batch, n_tokens, n_embed)
    assert jnp.allclose(out_fast, ref, atol=1e-6), "VMEM-table path mismatch vs reference"

    # Large-table code path: HBM row-gather with a shared DMA semaphore (forced
    # here for coverage).
    out_hbm = jax.block_until_ready(
        clip_embedding(tokens, token_table, pos_table, force_hbm_gather=True))
    assert jnp.allclose(out_hbm, ref, atol=1e-6), "HBM-gather path mismatch vs reference"

    print("KERNEL_OK")
</pallas_src>

<mosaic_0001>
module attributes {stable_mosaic.version = 11 : i64} {
  func.func @_embed_vmem_table_kernel(%arg0: i32, %arg1: memref<16xi32, #tpu.memory_space<smem>>, %arg2: memref<64x128xf32, #tpu.memory_space<vmem>>, %arg3: memref<8x128xf32, #tpu.memory_space<vmem>>, %arg4: memref<1x8x128xf32, #tpu.memory_space<vmem>>) attributes {dimension_semantics = [#tpu.dimension_semantics<parallel>], iteration_bounds = array<i64: 2>, scalar_prefetch = 1 : i64, scratch_operands = 0 : i64, tpu.core_type = #tpu.core_type<tc>, window_params = [{pipeline_mode = #tpu.pipeline_mode<synchronous>, transform_indices = @transform_0, window_bounds = array<i64: 64, 128>}, {pipeline_mode = #tpu.pipeline_mode<synchronous>, transform_indices = @transform_1, window_bounds = array<i64: 8, 128>}, {transform_indices = @transform_2, window_bounds = array<i64: 1, 8, 128>}]} {
    %c1_i32 = arith.constant 1 : i32
    %0 = arith.muli %arg0, %c1_i32 : i32
    %c8_i32 = arith.constant 8 : i32
    %1 = arith.muli %0, %c8_i32 : i32
    %c0_i32 = arith.constant 0 : i32
    %c0_i32_0 = arith.constant 0 : i32
    %2 = arith.addi %1, %c0_i32_0 : i32
    %3 = arith.addi %2, %c0_i32 : i32
    %4 = arith.index_cast %3 : i32 to index
    %5 = memref.load %arg1[%4] : memref<16xi32, #tpu.memory_space<smem>>
    %6 = arith.index_cast %5 : i32 to index
    %c0 = arith.constant 0 : index
    %7 = vector.load %arg2[%6, %c0] : memref<64x128xf32, #tpu.memory_space<vmem>>, vector<1x128xf32>
    %8 = arith.index_cast %c0_i32 : i32 to index
    %c0_1 = arith.constant 0 : index
    %9 = vector.load %arg3[%8, %c0_1] : memref<8x128xf32, #tpu.memory_space<vmem>>, vector<1x128xf32>
    %10 = arith.addf %7, %9 : vector<1x128xf32>
    %c0_2 = arith.constant 0 : index
    %11 = arith.index_cast %c0_i32 : i32 to index
    %c0_3 = arith.constant 0 : index
    %12 = vector.load %arg4[%c0_2, %11, %c0_3] : memref<1x8x128xf32, #tpu.memory_space<vmem>>, vector<1x1x128xf32>
    %13 = vector.shape_cast %12 : vector<1x1x128xf32> to vector<1x128xf32>
    %14 = vector.shape_cast %10 : vector<1x128xf32> to vector<1x1x128xf32>
    tpu.vector_store %arg4[%c0_2, %11, %c0_3], %14 {strides = array<i32>} : memref<1x8x128xf32, #tpu.memory_space<vmem>>, vector<1x1x128xf32>,
    %c1_i32_4 = arith.constant 1 : i32
    %c0_i32_5 = arith.constant 0 : i32
    %15 = arith.addi %1, %c0_i32_5 : i32
    %16 = arith.addi %15, %c1_i32_4 : i32
    %17 = arith.index_cast %16 : i32 to index
    %18 = memref.load %arg1[%17] : memref<16xi32, #tpu.memory_space<smem>>
    %19 = arith.index_cast %18 : i32 to index
    %c0_6 = arith.constant 0 : index
    %20 = vector.load %arg2[%19, %c0_6] : memref<64x128xf32, #tpu.memory_space<vmem>>, vector<1x128xf32>
    %21 = arith.index_cast %c1_i32_4 : i32 to index
    %c0_7 = arith.constant 0 : index
    %22 = vector.load %arg3[%21, %c0_7] : memref<8x128xf32, #tpu.memory_space<vmem>>, vector<1x128xf32>
    %23 = arith.addf %20, %22 : vector<1x128xf32>
    %c0_8 = arith.constant 0 : index
    %24 = arith.index_cast %c1_i32_4 : i32 to index
    %c0_9 = arith.constant 0 : index
    %25 = vector.load %arg4[%c0_8, %24, %c0_9] : memref<1x8x128xf32, #tpu.memory_space<vmem>>, vector<1x1x128xf32>
    %26 = vector.shape_cast %25 : vector<1x1x128xf32> to vector<1x128xf32>
    %27 = vector.shape_cast %23 : vector<1x128xf32> to vector<1x1x128xf32>
    tpu.vector_store %arg4[%c0_8, %24, %c0_9], %27 {strides = array<i32>} : memref<1x8x128xf32, #tpu.memory_space<vmem>>, vector<1x1x128xf32>,
    %c2_i32 = arith.constant 2 : i32
    %c0_i32_10 = arith.constant 0 : i32
    %28 = arith.addi %1, %c0_i32_10 : i32
    %29 = arith.addi %28, %c2_i32 : i32
    %30 = arith.index_cast %29 : i32 to index
    %31 = memref.load %arg1[%30] : memref<16xi32, #tpu.memory_space<smem>>
    %32 = arith.index_cast %31 : i32 to index
    %c0_11 = arith.constant 0 : index
    %33 = vector.load %arg2[%32, %c0_11] : memref<64x128xf32, #tpu.memory_space<vmem>>, vector<1x128xf32>
    %34 = arith.index_cast %c2_i32 : i32 to index
    %c0_12 = arith.constant 0 : index
    %35 = vector.load %arg3[%34, %c0_12] : memref<8x128xf32, #tpu.memory_space<vmem>>, vector<1x128xf32>
    %36 = arith.addf %33, %35 : vector<1x128xf32>
    %c0_13 = arith.constant 0 : index
    %37 = arith.index_cast %c2_i32 : i32 to index
    %c0_14 = arith.constant 0 : index
    %38 = vector.load %arg4[%c0_13, %37, %c0_14] : memref<1x8x128xf32, #tpu.memory_space<vmem>>, vector<1x1x128xf32>
    %39 = vector.shape_cast %38 : vector<1x1x128xf32> to vector<1x128xf32>
    %40 = vector.shape_cast %36 : vector<1x128xf32> to vector<1x1x128xf32>
    tpu.vector_store %arg4[%c0_13, %37, %c0_14], %40 {strides = array<i32>} : memref<1x8x128xf32, #tpu.memory_space<vmem>>, vector<1x1x128xf32>,
    %c3_i32 = arith.constant 3 : i32
    %c0_i32_15 = arith.constant 0 : i32
    %41 = arith.addi %1, %c0_i32_15 : i32
    %42 = arith.addi %41, %c3_i32 : i32
    %43 = arith.index_cast %42 : i32 to index
    %44 = memref.load %arg1[%43] : memref<16xi32, #tpu.memory_space<smem>>
    %45 = arith.index_cast %44 : i32 to index
    %c0_16 = arith.constant 0 : index
    %46 = vector.load %arg2[%45, %c0_16] : memref<64x128xf32, #tpu.memory_space<vmem>>, vector<1x128xf32>
    %47 = arith.index_cast %c3_i32 : i32 to index
    %c0_17 = arith.constant 0 : index
    %48 = vector.load %arg3[%47, %c0_17] : memref<8x128xf32, #tpu.memory_space<vmem>>, vector<1x128xf32>
    %49 = arith.addf %46, %48 : vector<1x128xf32>
    %c0_18 = arith.constant 0 : index
    %50 = arith.index_cast %c3_i32 : i32 to index
    %c0_19 = arith.constant 0 : index
    %51 = vector.load %arg4[%c0_18, %50, %c0_19] : memref<1x8x128xf32, #tpu.memory_space<vmem>>, vector<1x1x128xf32>
    %52 = vector.shape_cast %51 : vector<1x1x128xf32> to vector<1x128xf32>
    %53 = vector.shape_cast %49 : vector<1x128xf32> to vector<1x1x128xf32>
    tpu.vector_store %arg4[%c0_18, %50, %c0_19], %53 {strides = array<i32>} : memref<1x8x128xf32, #tpu.memory_space<vmem>>, vector<1x1x128xf32>,
    %c4_i32 = arith.constant 4 : i32
    %c0_i32_20 = arith.constant 0 : i32
    %54 = arith.addi %1, %c0_i32_20 : i32
    %55 = arith.addi %54, %c4_i32 : i32
    %56 = arith.index_cast %55 : i32 to index
    %57 = memref.load %arg1[%56] : memref<16xi32, #tpu.memory_space<smem>>
    %58 = arith.index_cast %57 : i32 to index
    %c0_21 = arith.constant 0 : index
    %59 = vector.load %arg2[%58, %c0_21] : memref<64x128xf32, #tpu.memory_space<vmem>>, vector<1x128xf32>
    %60 = arith.index_cast %c4_i32 : i32 to index
    %c0_22 = arith.constant 0 : index
    %61 = vector.load %arg3[%60, %c0_22] : memref<8x128xf32, #tpu.memory_space<vmem>>, vector<1x128xf32>
    %62 = arith.addf %59, %61 : vector<1x128xf32>
    %c0_23 = arith.constant 0 : index
    %63 = arith.index_cast %c4_i32 : i32 to index
    %c0_24 = arith.constant 0 : index
    %64 = vector.load %arg4[%c0_23, %63, %c0_24] : memref<1x8x128xf32, #tpu.memory_space<vmem>>, vector<1x1x128xf32>
    %65 = vector.shape_cast %64 : vector<1x1x128xf32> to vector<1x128xf32>
    %66 = vector.shape_cast %62 : vector<1x128xf32> to vector<1x1x128xf32>
    tpu.vector_store %arg4[%c0_23, %63, %c0_24], %66 {strides = array<i32>} : memref<1x8x128xf32, #tpu.memory_space<vmem>>, vector<1x1x128xf32>,
    %c5_i32 = arith.constant 5 : i32
    %c0_i32_25 = arith.constant 0 : i32
    %67 = arith.addi %1, %c0_i32_25 : i32
    %68 = arith.addi %67, %c5_i32 : i32
    %69 = arith.index_cast %68 : i32 to index
    %70 = memref.load %arg1[%69] : memref<16xi32, #tpu.memory_space<smem>>
    %71 = arith.index_cast %70 : i32 to index
    %c0_26 = arith.constant 0 : index
    %72 = vector.load %arg2[%71, %c0_26] : memref<64x128xf32, #tpu.memory_space<vmem>>, vector<1x128xf32>
    %73 = arith.index_cast %c5_i32 : i32 to index
    %c0_27 = arith.constant 0 : index
    %74 = vector.load %arg3[%73, %c0_27] : memref<8x128xf32, #tpu.memory_space<vmem>>, vector<1x128xf32>
    %75 = arith.addf %72, %74 : vector<1x128xf32>
    %c0_28 = arith.constant 0 : index
    %76 = arith.index_cast %c5_i32 : i32 to index
    %c0_29 = arith.constant 0 : index
    %77 = vector.load %arg4[%c0_28, %76, %c0_29] : memref<1x8x128xf32, #tpu.memory_space<vmem>>, vector<1x1x128xf32>
    %78 = vector.shape_cast %77 : vector<1x1x128xf32> to vector<1x128xf32>
    %79 = vector.shape_cast %75 : vector<1x128xf32> to vector<1x1x128xf32>
    tpu.vector_store %arg4[%c0_28, %76, %c0_29], %79 {strides = array<i32>} : memref<1x8x128xf32, #tpu.memory_space<vmem>>, vector<1x1x128xf32>,
    %c6_i32 = arith.constant 6 : i32
    %c0_i32_30 = arith.constant 0 : i32
    %80 = arith.addi %1, %c0_i32_30 : i32
    %81 = arith.addi %80, %c6_i32 : i32
    %82 = arith.index_cast %81 : i32 to index
    %83 = memref.load %arg1[%82] : memref<16xi32, #tpu.memory_space<smem>>
    %84 = arith.index_cast %83 : i32 to index
    %c0_31 = arith.constant 0 : index
    %85 = vector.load %arg2[%84, %c0_31] : memref<64x128xf32, #tpu.memory_space<vmem>>, vector<1x128xf32>
    %86 = arith.index_cast %c6_i32 : i32 to index
    %c0_32 = arith.constant 0 : index
    %87 = vector.load %arg3[%86, %c0_32] : memref<8x128xf32, #tpu.memory_space<vmem>>, vector<1x128xf32>
    %88 = arith.addf %85, %87 : vector<1x128xf32>
    %c0_33 = arith.constant 0 : index
    %89 = arith.index_cast %c6_i32 : i32 to index
    %c0_34 = arith.constant 0 : index
    %90 = vector.load %arg4[%c0_33, %89, %c0_34] : memref<1x8x128xf32, #tpu.memory_space<vmem>>, vector<1x1x128xf32>
    %91 = vector.shape_cast %90 : vector<1x1x128xf32> to vector<1x128xf32>
    %92 = vector.shape_cast %88 : vector<1x128xf32> to vector<1x1x128xf32>
    tpu.vector_store %arg4[%c0_33, %89, %c0_34], %92 {strides = array<i32>} : memref<1x8x128xf32, #tpu.memory_space<vmem>>, vector<1x1x128xf32>,
    %c7_i32 = arith.constant 7 : i32
    %c0_i32_35 = arith.constant 0 : i32
    %93 = arith.addi %1, %c0_i32_35 : i32
    %94 = arith.addi %93, %c7_i32 : i32
    %95 = arith.index_cast %94 : i32 to index
    %96 = memref.load %arg1[%95] : memref<16xi32, #tpu.memory_space<smem>>
    %97 = arith.index_cast %96 : i32 to index
    %c0_36 = arith.constant 0 : index
    %98 = vector.load %arg2[%97, %c0_36] : memref<64x128xf32, #tpu.memory_space<vmem>>, vector<1x128xf32>
    %99 = arith.index_cast %c7_i32 : i32 to index
    %c0_37 = arith.constant 0 : index
    %100 = vector.load %arg3[%99, %c0_37] : memref<8x128xf32, #tpu.memory_space<vmem>>, vector<1x128xf32>
    %101 = arith.addf %98, %100 : vector<1x128xf32>
    %c0_38 = arith.constant 0 : index
    %102 = arith.index_cast %c7_i32 : i32 to index
    %c0_39 = arith.constant 0 : index
    %103 = vector.load %arg4[%c0_38, %102, %c0_39] : memref<1x8x128xf32, #tpu.memory_space<vmem>>, vector<1x1x128xf32>
    %104 = vector.shape_cast %103 : vector<1x1x128xf32> to vector<1x128xf32>
    %105 = vector.shape_cast %101 : vector<1x128xf32> to vector<1x1x128xf32>
    tpu.vector_store %arg4[%c0_38, %102, %c0_39], %105 {strides = array<i32>} : memref<1x8x128xf32, #tpu.memory_space<vmem>>, vector<1x1x128xf32>,
    %c8_i32_40 = arith.constant 8 : i32
    return
  }
  func.func @transform_0(%arg0: i32, %arg1: memref<16xi32, #tpu.memory_space<smem>>) -> (i32, i32) {
    %c0_i32 = arith.constant 0 : i32
    %c0_i32_0 = arith.constant 0 : i32
    %c0_i32_1 = arith.constant 0 : i32
    return %c0_i32, %c0_i32_0 : i32, i32
  }
  func.func @transform_1(%arg0: i32, %arg1: memref<16xi32, #tpu.memory_space<smem>>) -> (i32, i32) {
    %c0_i32 = arith.constant 0 : i32
    %c0_i32_0 = arith.constant 0 : i32
    %c0_i32_1 = arith.constant 0 : i32
    return %c0_i32, %c0_i32_0 : i32, i32
  }
  func.func @transform_2(%arg0: i32, %arg1: memref<16xi32, #tpu.memory_space<smem>>) -> (i32, i32, i32) {
    %c0_i32 = arith.constant 0 : i32
    %c0_i32_0 = arith.constant 0 : i32
    %c0_i32_1 = arith.constant 0 : i32
    return %arg0, %c0_i32, %c0_i32_0 : i32, i32, i32
  }
}

</mosaic_0001>

<llo_original>
// kernel: tpu_custom_call.1
$region0: #{tpu_custom_call.1}
  #allocation0 [shape = 'u32[]', space=smem, size = 0x4, offset = 0x4, fixed_abs, tag = 'smem constant byte address 0x4 - core index']
  #allocation1 [shape = 'u32[72,128]{1,0:T(1,128)}', space=vmem, size = 0x9000, scoped, tag = 'internal scratch']
  #allocation2 [shape = 's32[1]{0}', space=sflag, size = 0x4, scoped, tag = 'scoped memory for tpu_custom_call.1']
  #allocation3 [shape = 'u8[512]{0}', space=smem, size = 0x200, scoped, tag = 'prefetched SMEM operand 0']
  %s0 = inlined_call_operand.hbm [shape: s32[16], index: 0, kind: input, shape index: {}]
  %s1 = inlined_call_operand.hbm [shape: f32[64,128], index: 1, kind: input, shape index: {}]
  %s2 = inlined_call_operand.hbm [shape: f32[8,128], index: 2, kind: input, shape index: {}]
  %s3 = inlined_call_operand.hbm [shape: f32[2,8,128], index: 3, kind: output, shape index: {}]
  %s4 = sld [smem:[#allocation0]]
  $region49: #{tpu_custom_call.1} parent=0
    _
  %s6 = ssub.s32 1, %s4
  %s7 = scalar_select 0, %s6, %s4
  %s9 = sshll.u32 %s0, 4
  %s10 = int_to_ptr.hbm [resolvable:$true] %s9
  %12 = dma.hbm_to_smem %s10, 16, [#allocation3], [#allocation2]
  %14 = dma.done [#allocation2], 16
  %15 = sfence
  $region1: #{tpu_custom_call.1} parent=0
    #allocation4 [shape = 'u8[32768]{0}', space=vmem, size = 0x8000, scoped, tag = 'input window, operand 1, single buffered']
    #allocation5 [shape = 's32[2]{0}', space=sflag, size = 0x8, scoped, tag = 'scoped memory for tpu_custom_call.1']
    #allocation6 [shape = 's32[2]{0}', space=sflag, size = 0x8, scoped, tag = 'scoped memory for tpu_custom_call.1']
    #allocation7 [shape = 'u8[4096]{0}', space=vmem, size = 0x1000, scoped, tag = 'input window, operand 2, single buffered']
    #allocation8 [shape = 's32[1]{0}', space=sflag, size = 0x4, scoped, tag = 'scoped memory for tpu_custom_call.1']
    #allocation9 [shape = 'u8[8192]{0}', space=vmem, size = 0x2000, scoped, tag = 'output window, operand 0']
    %16 = vsyncpa [#allocation5], 0
    %17 = vsyncpa [#allocation8], 0
    %18 = vsyncpa [#allocation6], 0
    %s19 = scalar_lea.sflag [#allocation6], 1
    %20 = vsyncpa %s19, 0
    loop: start=0, step=1, limit=4
    $region2: #{tpu_custom_call.1} parent=1 // loop_pre_header
      _
    $region3: #{tpu_custom_call.1} parent=1 // loop_header
      %s22 = sphi 0, %s26
      %p23 = scmp.ge.s32.totalorder %s22, 4
      %s30 = sphi 0, %s30
      %s32 = sphi 0, %s30
      %s33 = sphi 0, %s32
      %s47 = sphi 0, %s33
      %s51 = sphi 0, %s51
      %s53 = sphi 0, %s51
      %s54 = sphi 0, %s53
      %s68 = sphi 0, %s54
      %s74 = sphi 0, %s76
      %s77 = sphi 0, %s74
      %s78 = sphi 0, %s77
      %s94 = sphi 0, %s78
    $region4: #{tpu_custom_call.1} parent=1 // loop_header_branch
      %25 = sbr.rel (%p23) target = $region8
    $region5: #{tpu_custom_call.1} parent=1 // loop_body
      %s27 = ssub.s32 %s22, 1
      %s28 = ssub.s32 %s22, 2
      %s29 = sadd.s32 %s22, 1
      %s31 = sadd.s32 %s30, 1
      %p34 = scmp.eq.s32.totalorder %s22, 1
      %p35 = scmp.ne.s32.totalorder %s30, %s32
      %p36 = scmp.eq.s32.totalorder %s22, 0
      %p37 = por %p35, %p36
      %p38 = scmp.ne.s32.totalorder %s30, %s32
      %p39 = scmp.eq.s32.totalorder %s27, 1
      %p40 = por %p38, %p39
      %p41 = scmp.ne.s32.totalorder %s32, %s33
      %p42 = scmp.eq.s32.totalorder %s27, 0
      %p43 = por %p41, %p42
      %p44 = scmp.ne.s32.totalorder %s32, %s33
      %p45 = scmp.eq.s32.totalorder %s28, 1
      %p46 = por %p44, %p45
      %p48 = scmp.ne.s32.totalorder %s33, %s47
      %p49 = scmp.eq.s32.totalorder %s28, 0
      %p50 = por %p48, %p49
      %s52 = sadd.s32 %s51, 1
      %p55 = scmp.eq.s32.totalorder %s22, 1
      %p56 = scmp.ne.s32.totalorder %s51, %s53
      %p57 = scmp.eq.s32.totalorder %s22, 0
      %p58 = por %p56, %p57
      %p59 = scmp.ne.s32.totalorder %s51, %s53
      %p60 = scmp.eq.s32.totalorder %s27, 1
      %p61 = por %p59, %p60
      %p62 = scmp.ne.s32.totalorder %s53, %s54
      %p63 = scmp.eq.s32.totalorder %s27, 0
      %p64 = por %p62, %p63
      %p65 = scmp.ne.s32.totalorder %s53, %s54
      %p66 = scmp.eq.s32.totalorder %s28, 1
      %p67 = por %p65, %p66
      %p69 = scmp.ne.s32.totalorder %s54, %s68
      %p70 = scmp.eq.s32.totalorder %s28, 0
      %p71 = por %p69, %p70
      %s72 = ssub.s32 %s22, %s29
      %p73 = scmp.eq.s32.totalorder %s72, 0
      %s75 = sadd.s32 %s74, 1
      %s76 = scalar_select %p73, %s74, %s75
      %p79 = pneg %p73
      %p80 = scmp.eq.s32.totalorder %s22, 1
      %p81 = por %p79, %p80
      %p82 = scmp.ne.s32.totalorder %s74, %s77
      %p83 = scmp.eq.s32.totalorder %s22, 0
      %p84 = por %p82, %p83
      %p85 = scmp.ne.s32.totalorder %s74, %s77
      %p86 = scmp.eq.s32.totalorder %s27, 1
      %p87 = por %p85, %p86
      %p88 = scmp.ne.s32.totalorder %s77, %s78
      %p89 = scmp.eq.s32.totalorder %s27, 0
      %p90 = por %p88, %p89
      %p91 = scmp.ne.s32.totalorder %s77, %s78
      %p92 = scmp.eq.s32.totalorder %s28, 1
      %p93 = por %p91, %p92
      %p95 = scmp.ne.s32.totalorder %s78, %s94
      %p96 = scmp.eq.s32.totalorder %s28, 0
      %p97 = por %p95, %p96
      %p98 = scmp.le.s32.totalorder 1, %s22
      %p99 = scmp.lt.s32.totalorder %s22, 3
      %p100 = pnand %p98, %p99
      %p101 = pneg %p100
      // Predicated region
      $region9: #{tpu_custom_call.1} parent=5 // pred_check
        _
      $region10: #{tpu_custom_call.1} parent=5 // pred_check_branch
        %103 = sbr.rel (%p100) target = $region12
      $region11: #{tpu_custom_call.1} parent=5 // pred_region
        %s104 = ssub.s32 %s22, 1
        // Predicated region
        $region13: #{tpu_custom_call.1} parent=11 // pred_check
          %p105 = pneg %p43
        $region14: #{tpu_custom_call.1} parent=11 // pred_check_branch
          %107 = sbr.rel (%p105) target = $region16
        $region15: #{tpu_custom_call.1} parent=11 // pred_region
          %109 = vsyncadd [#allocation5], 0
          %s110 = sshll.u32 %s1, 4
          %s111 = int_to_ptr.hbm [resolvable:$true] %s110
          %s112 = sshll.u32 [#allocation4], 4
          %s113 = int_to_ptr.vmem [resolvable:$true] %s112
          %118 = dma.hbm_to_vmem [thread:$0]  %s111, 1024, %s113, [#allocation5], 128, 128, 8
        $region16: #{tpu_custom_call.1} parent=11 // pred_fallthru
          _
        // Predicated region
        $region17: #{tpu_custom_call.1} parent=11 // pred_check
          %p119 = pneg %p64
        $region18: #{tpu_custom_call.1} parent=11 // pred_check_branch
          %121 = sbr.rel (%p119) target = $region20
        $region19: #{tpu_custom_call.1} parent=11 // pred_region
          %123 = vsyncadd [#allocation8], 0
          %s125 = sshll.u32 %s2, 4
          %s126 = int_to_ptr.hbm [resolvable:$true] %s125
          %s127 = sshll.u32 [#allocation7], 4
          %s128 = int_to_ptr.vmem [resolvable:$true] %s127
          %130 = dma.hbm_to_vmem [thread:$0]  %s126, 128, %s128, [#allocation8]
        $region20: #{tpu_custom_call.1} parent=11 // pred_fallthru
          _
      $region12: #{tpu_custom_call.1} parent=5 // pred_fallthru
        _
      %p131 = scmp.lt.s32.totalorder %s22, 2
      // Predicated region
      $region21: #{tpu_custom_call.1} parent=5 // pred_check
        %p132 = pneg %p131
      $region22: #{tpu_custom_call.1} parent=5 // pred_check_branch
        %134 = sbr.rel (%p132) target = $region24
      $region23: #{tpu_custom_call.1} parent=5 // pred_region
        _
      $region24: #{tpu_custom_call.1} parent=5 // pred_fallthru
        _
      %p135 = scmp.le.s32.totalorder 1, %s22
      %p136 = scmp.lt.s32.totalorder %s22, 3
      %p137 = pnand %p135, %p136
      %p138 = pneg %p137
      // Predicated region
      $region25: #{tpu_custom_call.1} parent=5 // pred_check
        _
      $region26: #{tpu_custom_call.1} parent=5 // pred_check_branch
        %140 = sbr.rel (%p137) target = $region28
      $region27: #{tpu_custom_call.1} parent=5 // pred_region
        %s141 = ssub.s32 %s22, 1
        // Predicated region
        $region29: #{tpu_custom_call.1} parent=27 // pred_check
          %p142 = pneg %p43
        $region30: #{tpu_custom_call.1} parent=27 // pred_check_branch
          %144 = sbr.rel (%p142) target = $region32
        $region31: #{tpu_custom_call.1} parent=27 // pred_region
          %146 = dma.done [#allocation5], 1024
        $region32: #{tpu_custom_call.1} parent=27 // pred_fallthru
          _
        // Predicated region
        $region33: #{tpu_custom_call.1} parent=27 // pred_check
          %p147 = pneg %p64
        $region34: #{tpu_custom_call.1} parent=27 // pred_check_branch
          %149 = sbr.rel (%p147) target = $region36
        $region35: #{tpu_custom_call.1} parent=27 // pred_region
          %151 = dma.done [#allocation8], 128
        $region36: #{tpu_custom_call.1} parent=27 // pred_fallthru
          _
        %p152 = pneg %p43
        %p153 = pneg %p40
        %p154 = pneg %p64
        %p155 = pneg %p61
        %p156 = pneg %p90
        %p157 = pneg %p87
        %s158 = sand.u32 %s77, 1
        %s159 = scalar_lea.sflag [#allocation6], %s158
        %s160 = sand.u32 %s77, 1
        %s161 = smul.addr %s160, 8
        %s162 = scalar_lea.vmem [#allocation9], %s161
        %s163 = smul.u32 %s27, 8
        %s164 = sld [smem:[#allocation3 + %s163]]
        %s165 = scalar_lea.vmem [#allocation4], %s164
        %v166 = vld [vmem:[%s165] sm:$0x1]
        %v167 = vld [vmem:[#allocation7] sm:$0x1]
        %v168 = vadd.f32 %v166, %v167
        %169 = vst [vmem:[%s162] sm:$0x1] %v168
        %s170 = sadd.s32 %s163, 1
        %s171 = sld [smem:[#allocation3 + %s170]]
        %s172 = scalar_lea.vmem [#allocation4], %s171
        %v173 = vld [vmem:[%s172] sm:$0x1]
        %v174 = vld [vmem:[#allocation7 + $0x1] sm:$0x1]
        %v175 = vadd.f32 %v173, %v174
        %176 = vst [vmem:[%s162 + $0x1] sm:$0x1] %v175
        %s177 = sadd.s32 %s163, 2
        %s178 = sld [smem:[#allocation3 + %s177]]
        %s179 = scalar_lea.vmem [#allocation4], %s178
        %v180 = vld [vmem:[%s179] sm:$0x1]
        %v181 = vld [vmem:[#allocation7 + $0x2] sm:$0x1]
        %v182 = vadd.f32 %v180, %v181
        %183 = vst [vmem:[%s162 + $0x2] sm:$0x1] %v182
        %s184 = sadd.s32 %s163, 3
        %s185 = sld [smem:[#allocation3 + %s184]]
        %s186 = scalar_lea.vmem [#allocation4], %s185
        %v187 = vld [vmem:[%s186] sm:$0x1]
        %v188 = vld [vmem:[#allocation7 + $0x3] sm:$0x1]
        %v189 = vadd.f32 %v187, %v188
        %190 = vst [vmem:[%s162 + $0x3] sm:$0x1] %v189
        %s191 = sadd.s32 %s163, 4
        %s192 = sld [smem:[#allocation3 + %s191]]
        %s193 = scalar_lea.vmem [#allocation4], %s192
        %v194 = vld [vmem:[%s193] sm:$0x1]
        %v195 = vld [vmem:[#allocation7 + $0x4] sm:$0x1]
        %v196 = vadd.f32 %v194, %v195
        %197 = vst [vmem:[%s162 + $0x4] sm:$0x1] %v196
        %s198 = sadd.s32 %s163, 5
        %s199 = sld [smem:[#allocation3 + %s198]]
        %s200 = scalar_lea.vmem [#allocation4], %s199
        %v201 = vld [vmem:[%s200] sm:$0x1]
        %v202 = vld [vmem:[#allocation7 + $0x5] sm:$0x1]
        %v203 = vadd.f32 %v201, %v202
        %204 = vst [vmem:[%s162 + $0x5] sm:$0x1] %v203
        %s205 = sadd.s32 %s163, 6
        %s206 = sld [smem:[#allocation3 + %s205]]
        %s207 = scalar_lea.vmem [#allocation4], %s206
        %v208 = vld [vmem:[%s207] sm:$0x1]
        %v209 = vld [vmem:[#allocation7 + $0x6] sm:$0x1]
        %v210 = vadd.f32 %v208, %v209
        %211 = vst [vmem:[%s162 + $0x6] sm:$0x1] %v210
        %s212 = sadd.s32 %s163, 7
        %s213 = sld [smem:[#allocation3 + %s212]]
        %s214 = scalar_lea.vmem [#allocation4], %s213
        %v215 = vld [vmem:[%s214] sm:$0x1]
        %v216 = vld [vmem:[#allocation7 + $0x7] sm:$0x1]
        %v217 = vadd.f32 %v215, %v216
        %218 = vst [vmem:[%s162 + $0x7] sm:$0x1] %v217
        %s219 = sand.u32 %s77, 1
        %s220 = scalar_lea.sflag [#allocation6], %s219
        %s221 = sand.u32 %s77, 1
        %s222 = smul.addr %s221, 8
        %s223 = scalar_lea.vmem [#allocation9], %s222
        // Predicated region
        $region37: #{tpu_custom_call.1} parent=27 // pred_check
          %p224 = pneg %p87
        $region38: #{tpu_custom_call.1} parent=27 // pred_check_branch
          %226 = sbr.rel (%p224) target = $region40
        $region39: #{tpu_custom_call.1} parent=27 // pred_region
          %228 = vsyncadd %s220, 0
          %s229 = smul.addr %s27, 8
          %s230 = scalar_lea.hbm %s3, %s229
          %s232 = sshll.u32 %s223, 4
          %s233 = int_to_ptr.vmem [resolvable:$true] %s232
          %s234 = sshll.u32 %s230, 4
          %s235 = int_to_ptr.hbm [resolvable:$true] %s234
          %237 = dma.vmem_to_hbm [thread:$0]  %s233, 128, %s235, %s220
        $region40: #{tpu_custom_call.1} parent=27 // pred_fallthru
          _
      $region28: #{tpu_custom_call.1} parent=5 // pred_fallthru
        _
      %p238 = scmp.le.s32.totalorder 2, %s22
      // Predicated region
      $region41: #{tpu_custom_call.1} parent=5 // pred_check
        %p239 = pneg %p238
      $region42: #{tpu_custom_call.1} parent=5 // pred_check_branch
        %241 = sbr.rel (%p239) target = $region44
      $region43: #{tpu_custom_call.1} parent=5 // pred_region
        %s242 = ssub.s32 %s22, 2
        // Predicated region
        $region45: #{tpu_custom_call.1} parent=43 // pred_check
          %p243 = pneg %p93
        $region46: #{tpu_custom_call.1} parent=43 // pred_check_branch
          %245 = sbr.rel (%p243) target = $region48
        $region47: #{tpu_custom_call.1} parent=43 // pred_region
          %s246 = sand.u32 %s78, 1
          %s247 = scalar_lea.sflag [#allocation6], %s246
          %s248 = sand.u32 %s78, 1
          %s249 = smul.addr %s248, 8
          %s250 = scalar_lea.vmem [#allocation9], %s249
          %252 = dma.done %s247, 128
        $region48: #{tpu_custom_call.1} parent=43 // pred_fallthru
          _
      $region44: #{tpu_custom_call.1} parent=5 // pred_fallthru
        _
    $region6: #{tpu_custom_call.1} parent=1 // loop_footer
      %s26 = sadd.s32 1, %s22
    $region7: #{tpu_custom_call.1} parent=1 // loop_footer_branch
      %21 = sbr.rel target = $region3
    $region8: #{tpu_custom_call.1} parent=1 // loop_exit
      _
    %253 = vsyncpa [#allocation5], 1
    %s254 = scalar_lea.sflag [#allocation5], 1
    %255 = vsyncpa %s254, 1
    %256 = vsyncpa [#allocation8], 1
    %257 = vsyncpa [#allocation6], 1
    %s258 = scalar_lea.sflag [#allocation6], 1
    %259 = vsyncpa %s258, 1

</llo_original>
